<compile_context>
chip_gen: v5e
topology: v5e:2x2
jax: 0.10.0
libtpu: 0.0.40
codegen_flags: <defaults>
</compile_context>

<pallas_src>
import functools

import jax
import jax.numpy as jnp
from jax.experimental import pallas as pl
from jax.experimental.pallas import tpu as pltpu


def _round_up(x, m):
    return (x + m - 1) // m * m


def _pad2(a, rows, cols):
    pr, pc = rows - a.shape[0], cols - a.shape[1]
    if pr == 0 and pc == 0:
        return a
    return jnp.pad(a, ((0, pr), (0, pc)))


def _device_plan():
    """Per-generation tile / VMEM-limit table."""
    kind = ""
    try:
        kind = jax.devices()[0].device_kind.lower()
    except Exception:
        pass
    if "v7" in kind or "7x" in kind:
        # v7x: 64 MiB physical VMEM, ridge ~310 FLOP/byte -> moderate tiles,
        # cap total footprint well under the physical limit.
        return dict(tm=512, tn=1024, tk=512, vmem_limit=28 << 20)
    if "v6" in kind:
        # v6e: ridge ~650 FLOP/byte, 128 MiB physical VMEM -> biggest tiles.
        return dict(tm=1024, tn=2048, tk=512, vmem_limit=64 << 20)
    # v5e and default: ridge ~240 FLOP/byte, 128 MiB physical VMEM.
    return dict(tm=512, tn=1024, tk=512, vmem_limit=64 << 20)


def _pick_tile(dim128, t_max):
    """Pick a lane-aligned tile for an axis of (128-aligned) extent dim128.

    Prefer the largest multiple of 128 <= t_max that divides dim128 exactly
    (no grid padding).  If the best divisor is small (< t_max/2), use t_max and
    pad instead, to protect arithmetic intensity.
    """
    t_max = min(t_max, dim128)
    best = 128
    for cand in range(t_max, 127, -128):
        if dim128 % cand == 0:
            best = cand
            break
    if best == dim128 or best * 2 >= t_max:
        return best, dim128
    return t_max, _round_up(dim128, t_max)


def _lora_matmul_kernel(x_ref, w_ref, b_ref, a_ref, wb_ref, o_ref, acc_ref, *,
                        tk, x_resident):
    # x_ref:  (tm, Kp) if x_resident else (tm, tk)   bf16 input
    # w_ref:  (tk, tn)   base weight tile (stored [in, out])
    # b_ref:  (1, tn)    bias tile (f32)
    # a_ref:  (tm, rp)   precomputed alpha * (x @ Wa^T), bf16
    # wb_ref: (rp, tn)   LoRA B tile ([r_padded, out])
    # acc_ref:(tm, tn)   f32 accumulator scratch
    k = pl.program_id(2)
    nk = pl.num_programs(2)

    @pl.when(k == 0)
    def _():
        acc_ref[...] = jnp.zeros_like(acc_ref)

    if x_resident:
        koff = pl.multiple_of(k * tk, tk)
        x = x_ref[:, pl.ds(koff, tk)]
    else:
        x = x_ref[...]

    acc_ref[...] += jnp.dot(x, w_ref[...], preferred_element_type=jnp.float32)

    @pl.when(k == nk - 1)
    def _():
        lora = jnp.dot(a_ref[...], wb_ref[...],
                       preferred_element_type=jnp.float32)
        o_ref[...] = (acc_ref[...] + b_ref[...] + lora).astype(o_ref.dtype)


def _forward(x, prep, *, in_f, out_f, Kp, Np, rp, tn, tk, tm_max, vmem_limit,
             compute_dtype, out_dtype):
    wT, b2, waT, wbT = prep["wT"], prep["b2"], prep["waT"], prep["wbT"]

    lead_shape = x.shape[:-1]
    M = 1
    for d in lead_shape:
        M *= d

    # bf16 sublane packing: round M tile to a multiple of 16.
    tm = min(tm_max, _round_up(max(M, 1), 16))
    Mp = _round_up(M, tm)

    x2 = _pad2(x.reshape(M, in_f).astype(compute_dtype), Mp, Kp)

    # Rank-r LoRA projection (alpha already folded into waT): tiny XLA GEMM,
    # f32 accumulation, cast to bf16 for the in-kernel correction matmul.
    a2 = jnp.dot(x2, waT, preferred_element_type=jnp.float32).astype(compute_dtype)

    out_itemsize = jnp.dtype(out_dtype).itemsize

    def footprint(x_res):  # double-buffered inputs/outputs + f32 accumulator
        xb = tm * (Kp if x_res else tk) * 2 * 2
        wb = tk * tn * 2 * 2
        ab = tm * rp * 2 * 2
        wbb = rp * tn * 2 * 2
        bb = 8 * tn * 4 * 2
        ob = tm * tn * out_itemsize * 2
        accb = tm * tn * 4
        return xb + wb + ab + wbb + bb + ob + accb

    # Keep x K-resident per M tile (no re-streaming per N tile) when it fits.
    x_resident = footprint(True) <= int(0.85 * vmem_limit)

    n_i, n_j, n_k = Mp // tm, Np // tn, Kp // tk

    if x_resident:
        x_spec = pl.BlockSpec((tm, Kp), lambda i, j, k: (i, 0))
    else:
        x_spec = pl.BlockSpec((tm, tk), lambda i, j, k: (i, k))

    cost = pl.CostEstimate(
        flops=int(2 * Mp * Np * Kp + 2 * Mp * Np * rp),
        transcendentals=0,
        bytes_accessed=int(
            Mp * Kp * 2 * (1 if x_resident else n_j)
            + Kp * Np * 2 * n_i
            + Mp * rp * 2
            + rp * Np * 2 * n_i
            + Np * 4 * n_i
            + Mp * Np * out_itemsize),
    )

    kernel = functools.partial(_lora_matmul_kernel, tk=tk,
                               x_resident=x_resident)

    out2 = pl.pallas_call(
        kernel,
        out_shape=jax.ShapeDtypeStruct((Mp, Np), out_dtype),
        grid_spec=pltpu.PrefetchScalarGridSpec(
            num_scalar_prefetch=0,
            grid=(n_i, n_j, n_k),
            in_specs=[
                x_spec,                                            # x
                pl.BlockSpec((tk, tn), lambda i, j, k: (k, j)),    # W^T tile
                pl.BlockSpec((1, tn), lambda i, j, k: (0, j)),     # bias tile
                pl.BlockSpec((tm, rp), lambda i, j, k: (i, 0)),    # alpha*(x@Wa^T)
                pl.BlockSpec((rp, tn), lambda i, j, k: (0, j)),    # Wb^T tile
            ],
            out_specs=pl.BlockSpec((tm, tn), lambda i, j, k: (i, j)),
            scratch_shapes=[pltpu.VMEM((tm, tn), jnp.float32)],
        ),
        compiler_params=pltpu.CompilerParams(
            # Both M and N are parallel now (LoRA projection is precomputed,
            # so there is no cross-j scratch dependency); K is the reduction.
            dimension_semantics=("parallel", "parallel", "arbitrary"),
            vmem_limit_bytes=int(vmem_limit),
        ),
        cost_estimate=cost,
    )(x2, wT, b2, a2, wbT)

    if Mp != M or Np != out_f:
        out2 = out2[:M, :out_f]
    return out2.reshape(*lead_shape, out_f)


def make_linear_lora(w, b, w_a, w_b, alpha, *,
                     compute_dtype=jnp.bfloat16, out_dtype=None):
    """Prepare (cast/transpose/pad) the weights ONCE and return forward(x).

    w: [out, in]; b: [out]; w_a: [r, in]; w_b: [out, r]; alpha: python scalar.
    Use this in a real training/serving step so the weight transform is hoisted
    out of the hot path.
    """
    out_f, in_f = w.shape
    r = w_a.shape[0]
    if out_dtype is None:
        out_dtype = compute_dtype

    plan = _device_plan()
    Kp128 = _round_up(in_f, 128)
    Np128 = _round_up(out_f, 128)
    tk, Kp = _pick_tile(Kp128, plan["tk"])
    tn, Np = _pick_tile(Np128, plan["tn"])
    rp = _round_up(r, 128)   # lane-dense rank dimension (zero-padded -> exact)

    prep = dict(
        wT=_pad2(jnp.asarray(w, compute_dtype).T, Kp, Np),                 # [in, out]
        b2=_pad2(jnp.asarray(b, jnp.float32).reshape(1, out_f), 1, Np),    # [1, out]
        # alpha folded into Wa (f32 scale, then cast): [in, r_padded]
        waT=_pad2((float(alpha) * jnp.asarray(w_a, jnp.float32)).T
                  .astype(compute_dtype), Kp, rp),
        wbT=_pad2(jnp.asarray(w_b, compute_dtype).T, rp, Np),              # [r, out]
    )

    fwd = jax.jit(functools.partial(
        _forward, in_f=in_f, out_f=out_f, Kp=Kp, Np=Np, rp=rp,
        tn=tn, tk=tk, tm_max=plan["tm"], vmem_limit=plan["vmem_limit"],
        compute_dtype=compute_dtype, out_dtype=out_dtype))

    return lambda x: fwd(x, prep)


def linear_lora_forward(x, w, b, w_a, w_b, alpha, **kwargs):
    """One-shot convenience wrapper (re-prepares weights on every call)."""
    return make_linear_lora(w, b, w_a, w_b, alpha, **kwargs)(x)


if __name__ == "__main__":
    key = jax.random.PRNGKey(0)
    k1, k2, k3, k4, k5, k6, k7, k8 = jax.random.split(key, 8)

    # --- Case 1: tiny shapes, module-faithful init (w_b == 0 as in __init__). ---
    B, S, in_f, out_f, r, alpha = 2, 8, 32, 32, 8, 2.0
    x = jax.random.normal(k1, (B, S, in_f), jnp.float32)
    w = jax.random.normal(k2, (out_f, in_f), jnp.float32) * 0.1
    b = jax.random.normal(k3, (out_f,), jnp.float32) * 0.1
    w_a = jax.random.normal(k4, (r, in_f), jnp.float32) * 0.1
    w_b = jnp.zeros((out_f, r), jnp.float32)

    out = jax.block_until_ready(linear_lora_forward(x, w, b, w_a, w_b, alpha))
    ref = (x @ w.T + b) + alpha * ((x @ w_a.T) @ w_b.T)
    assert out.shape == (B, S, out_f)
    assert jnp.allclose(out.astype(jnp.float32), ref, atol=3e-2, rtol=3e-2), \
        "case 1 mismatch vs reference"

    # --- Case 2: padding, multi-step K grid, live LoRA branch, prepared weights. ---
    B2, S2, in2, outf2, r2, alpha2 = 2, 256, 1280, 640, 8, 0.5
    x_2 = jax.random.normal(k5, (B2, S2, in2), jnp.float32)
    w_2 = jax.random.normal(k6, (outf2, in2), jnp.float32) / jnp.sqrt(in2)
    b_2 = jnp.zeros((outf2,), jnp.float32)
    w_a2 = jax.random.normal(k7, (r2, in2), jnp.float32) / jnp.sqrt(in2)
    w_b2 = jax.random.normal(k8, (outf2, r2), jnp.float32) / jnp.sqrt(r2)

    fwd2 = make_linear_lora(w_2, b_2, w_a2, w_b2, alpha2)   # hoisted weight prep
    out_2 = jax.block_until_ready(fwd2(x_2))
    ref_2 = (x_2 @ w_2.T + b_2) + alpha2 * ((x_2 @ w_a2.T) @ w_b2.T)
    assert out_2.shape == (B2, S2, outf2)
    assert jnp.allclose(out_2.astype(jnp.float32), ref_2, atol=5e-2, rtol=5e-2), \
        "case 2 mismatch vs reference (bf16 tolerance)"

    print("KERNEL_OK")
</pallas_src>

<mosaic_0001>
module attributes {stable_mosaic.version = 11 : i64} {
  func.func @_lora_matmul_kernel(%arg0: i32, %arg1: i32, %arg2: i32, %arg3: memref<16x128xbf16, #tpu.memory_space<vmem>>, %arg4: memref<128x128xbf16, #tpu.memory_space<vmem>>, %arg5: memref<1x128xf32, #tpu.memory_space<vmem>>, %arg6: memref<16x128xbf16, #tpu.memory_space<vmem>>, %arg7: memref<128x128xbf16, #tpu.memory_space<vmem>>, %arg8: memref<16x128xbf16, #tpu.memory_space<vmem>>, %arg9: memref<16x128xf32, #tpu.memory_space<vmem>>) attributes {dimension_semantics = [#tpu.dimension_semantics<parallel>, #tpu.dimension_semantics<parallel>, #tpu.dimension_semantics<arbitrary>], iteration_bounds = array<i64: 1, 1, 1>, scalar_prefetch = 0 : i64, scratch_operands = 1 : i64, tpu.core_type = #tpu.core_type<tc>, window_params = [{transform_indices = @transform_0, window_bounds = array<i64: 16, 128>}, {transform_indices = @transform_1, window_bounds = array<i64: 128, 128>}, {transform_indices = @transform_2, window_bounds = array<i64: 1, 128>}, {transform_indices = @transform_3, window_bounds = array<i64: 16, 128>}, {transform_indices = @transform_4, window_bounds = array<i64: 128, 128>}, {transform_indices = @transform_5, window_bounds = array<i64: 16, 128>}]} {
    %c0_i32 = arith.constant 0 : i32
    %0 = arith.cmpi eq, %arg2, %c0_i32 : i32
    %1 = arith.extui %0 : i1 to i32
    %c0_i32_0 = arith.constant 0 : i32
    %2 = arith.cmpi ne, %1, %c0_i32_0 : i32
    scf.if %2 {
      %cst_9 = arith.constant 0.000000e+00 : f32
      %15 = vector.broadcast %cst_9 : f32 to vector<16x128xf32>
      %c0_10 = arith.constant 0 : index
      %c0_11 = arith.constant 0 : index
      %16 = vector.load %arg9[%c0_10, %c0_11] : memref<16x128xf32, #tpu.memory_space<vmem>>, vector<16x128xf32>
      tpu.vector_store %arg9[%c0_10, %c0_11], %15 {strides = array<i32>} : memref<16x128xf32, #tpu.memory_space<vmem>>, vector<16x128xf32>,
    } else {
    }
    %c128_i32 = arith.constant 128 : i32
    %3 = arith.muli %arg2, %c128_i32 : i32
    %4 = tpu.assume_multiple %3, 128 : i32
    %c0 = arith.constant 0 : index
    %5 = arith.index_cast %4 : i32 to index
    %6 = vector.load %arg3[%c0, %5] : memref<16x128xbf16, #tpu.memory_space<vmem>>, vector<16x128xbf16>
    %c0_1 = arith.constant 0 : index
    %c0_2 = arith.constant 0 : index
    %7 = vector.load %arg9[%c0_1, %c0_2] : memref<16x128xf32, #tpu.memory_space<vmem>>, vector<16x128xf32>
    %c0_3 = arith.constant 0 : index
    %c0_4 = arith.constant 0 : index
    %8 = vector.load %arg4[%c0_3, %c0_4] : memref<128x128xbf16, #tpu.memory_space<vmem>>, vector<128x128xbf16>
    %cst = arith.constant dense<0.000000e+00> : vector<16x128xf32>
    %9 = tpu.matmul %6, %8, %cst {dimension_numbers = #tpu.dot_dimension_numbers<[1], [0], [0], [1], [0, 0, 1, 1], [], []>} : vector<16x128xbf16>, vector<128x128xbf16>, vector<16x128xf32> -> vector<16x128xf32>
    %10 = arith.addf %7, %9 : vector<16x128xf32>
    %c0_5 = arith.constant 0 : index
    %c0_6 = arith.constant 0 : index
    %11 = vector.load %arg9[%c0_5, %c0_6] : memref<16x128xf32, #tpu.memory_space<vmem>>, vector<16x128xf32>
    tpu.vector_store %arg9[%c0_5, %c0_6], %10 {strides = array<i32>} : memref<16x128xf32, #tpu.memory_space<vmem>>, vector<16x128xf32>,
    %c0_i32_7 = arith.constant 0 : i32
    %12 = arith.cmpi eq, %arg2, %c0_i32_7 : i32
    %13 = arith.extui %12 : i1 to i32
    %c0_i32_8 = arith.constant 0 : i32
    %14 = arith.cmpi ne, %13, %c0_i32_8 : i32
    scf.if %14 {
      %c0_9 = arith.constant 0 : index
      %c0_10 = arith.constant 0 : index
      %15 = vector.load %arg6[%c0_9, %c0_10] : memref<16x128xbf16, #tpu.memory_space<vmem>>, vector<16x128xbf16>
      %c0_11 = arith.constant 0 : index
      %c0_12 = arith.constant 0 : index
      %16 = vector.load %arg7[%c0_11, %c0_12] : memref<128x128xbf16, #tpu.memory_space<vmem>>, vector<128x128xbf16>
      %cst_13 = arith.constant dense<0.000000e+00> : vector<16x128xf32>
      %17 = tpu.matmul %15, %16, %cst_13 {dimension_numbers = #tpu.dot_dimension_numbers<[1], [0], [0], [1], [0, 0, 1, 1], [], []>} : vector<16x128xbf16>, vector<128x128xbf16>, vector<16x128xf32> -> vector<16x128xf32>
      %c0_14 = arith.constant 0 : index
      %c0_15 = arith.constant 0 : index
      %18 = vector.load %arg9[%c0_14, %c0_15] : memref<16x128xf32, #tpu.memory_space<vmem>>, vector<16x128xf32>
      %c0_16 = arith.constant 0 : index
      %c0_17 = arith.constant 0 : index
      %19 = vector.load %arg5[%c0_16, %c0_17] : memref<1x128xf32, #tpu.memory_space<vmem>>, vector<1x128xf32>
      %20 = vector.broadcast %19 : vector<1x128xf32> to vector<16x128xf32>
      %21 = arith.addf %18, %20 : vector<16x128xf32>
      %22 = arith.addf %21, %17 : vector<16x128xf32>
      %23 = arith.truncf %22 : vector<16x128xf32> to vector<16x128xbf16>
      %c0_18 = arith.constant 0 : index
      %c0_19 = arith.constant 0 : index
      %24 = vector.load %arg8[%c0_18, %c0_19] : memref<16x128xbf16, #tpu.memory_space<vmem>>, vector<16x128xbf16>
      tpu.vector_store %arg8[%c0_18, %c0_19], %23 {strides = array<i32>} : memref<16x128xbf16, #tpu.memory_space<vmem>>, vector<16x128xbf16>,
    } else {
    }
    return
  }
  func.func @transform_0(%arg0: i32, %arg1: i32, %arg2: i32) -> (i32, i32) {
    %c0_i32 = arith.constant 0 : i32
    %c0_i32_0 = arith.constant 0 : i32
    return %arg0, %c0_i32 : i32, i32
  }
  func.func @transform_1(%arg0: i32, %arg1: i32, %arg2: i32) -> (i32, i32) {
    %c0_i32 = arith.constant 0 : i32
    return %arg2, %arg1 : i32, i32
  }
  func.func @transform_2(%arg0: i32, %arg1: i32, %arg2: i32) -> (i32, i32) {
    %c0_i32 = arith.constant 0 : i32
    %c0_i32_0 = arith.constant 0 : i32
    return %c0_i32, %arg1 : i32, i32
  }
  func.func @transform_3(%arg0: i32, %arg1: i32, %arg2: i32) -> (i32, i32) {
    %c0_i32 = arith.constant 0 : i32
    %c0_i32_0 = arith.constant 0 : i32
    return %arg0, %c0_i32 : i32, i32
  }
  func.func @transform_4(%arg0: i32, %arg1: i32, %arg2: i32) -> (i32, i32) {
    %c0_i32 = arith.constant 0 : i32
    %c0_i32_0 = arith.constant 0 : i32
    return %c0_i32, %arg1 : i32, i32
  }
  func.func @transform_5(%arg0: i32, %arg1: i32, %arg2: i32) -> (i32, i32) {
    %c0_i32 = arith.constant 0 : i32
    return %arg0, %arg1 : i32, i32
  }
}

</mosaic_0001>

<llo_original>
// kernel: _forward.1
$region0: #{_forward.1}
  #allocation0 [shape = 'u32[]', space=smem, size = 0x4, offset = 0x4, fixed_abs, tag = 'smem constant byte address 0x4 - core index']
  #allocation1 [shape = 'u32[72,128]{1,0:T(1,128)}', space=vmem, size = 0x9000, scoped, tag = 'internal scratch']
  #allocation2 [shape = 'f32[16,128]{1,0:T(8,128)}', space=vmem, size = 0x2000, scoped, tag = 'scratch operand']
  %s0 = inlined_call_operand.vmem [shape: bf16[16,128], index: 0, kind: input, shape index: {}]
  %s1 = inlined_call_operand.vmem [shape: bf16[128,128], index: 1, kind: input, shape index: {}]
  %s2 = inlined_call_operand.vmem [shape: f32[1,128], index: 2, kind: input, shape index: {}]
  %s3 = inlined_call_operand.vmem [shape: bf16[16,128], index: 3, kind: input, shape index: {}]
  %s4 = inlined_call_operand.hbm [shape: bf16[128,128], index: 4, kind: input, shape index: {}]
  %s5 = inlined_call_operand.vmem [shape: bf16[16,128], index: 5, kind: output, shape index: {}]
  %s6 = sld [smem:[#allocation0]]
  $region42: #{_forward.1} parent=0
    _
  %s8 = ssub.s32 1, %s6
  %s9 = scalar_select 0, %s8, %s6
  $region1: #{_forward.1} parent=0
    #allocation3 [shape = 'u8[32768]{0}', space=vmem, size = 0x8000, scoped, tag = 'input window, operand 4, single buffered']
    #allocation4 [shape = 's32[1]{0}', space=sflag, size = 0x4, scoped, tag = 'scoped memory for _forward.1']
    %10 = vsyncpa [#allocation4], 0
    // Predicated region
    $region2: #{_forward.1} parent=1 // pred_check
      _
    $region3: #{_forward.1} parent=1 // pred_check_branch
      %12 = sbr.rel (0) target = $region5
    $region4: #{_forward.1} parent=1 // pred_region
      _
    $region5: #{_forward.1} parent=1 // pred_fallthru
      _
    // Predicated region
    $region6: #{_forward.1} parent=1 // pred_check
      _
    $region7: #{_forward.1} parent=1 // pred_check_branch
      %14 = sbr.rel (0) target = $region9
    $region8: #{_forward.1} parent=1 // pred_region
      _
    $region9: #{_forward.1} parent=1 // pred_fallthru
      _
    // Predicated region
    $region10: #{_forward.1} parent=1 // pred_check
      _
    $region11: #{_forward.1} parent=1 // pred_check_branch
      %16 = sbr.rel (0) target = $region13
    $region12: #{_forward.1} parent=1 // pred_region
      _
    $region13: #{_forward.1} parent=1 // pred_fallthru
      _
    // Predicated region
    $region14: #{_forward.1} parent=1 // pred_check
      _
    $region15: #{_forward.1} parent=1 // pred_check_branch
      %18 = sbr.rel (0) target = $region17
    $region16: #{_forward.1} parent=1 // pred_region
      _
    $region17: #{_forward.1} parent=1 // pred_fallthru
      _
    // Predicated region
    $region18: #{_forward.1} parent=1 // pred_check
      _
    $region19: #{_forward.1} parent=1 // pred_check_branch
      %20 = sbr.rel (0) target = $region21
    $region20: #{_forward.1} parent=1 // pred_region
      %22 = vsyncadd [#allocation4], 0
      %s23 = sshll.u32 %s4, 4
      %s24 = int_to_ptr.hbm [resolvable:$true] %s23
      %s25 = sshll.u32 [#allocation3], 4
      %s26 = int_to_ptr.vmem [resolvable:$true] %s25
      %31 = dma.hbm_to_vmem [thread:$0]  %s24, 1024, %s26, [#allocation4], 64, 64, 4
    $region21: #{_forward.1} parent=1 // pred_fallthru
      _
    // Predicated region
    $region22: #{_forward.1} parent=1 // pred_check
      _
    $region23: #{_forward.1} parent=1 // pred_check_branch
      %33 = sbr.rel (0) target = $region25
    $region24: #{_forward.1} parent=1 // pred_region
      %35 = dma.done [#allocation4], 1024
    $region25: #{_forward.1} parent=1 // pred_fallthru
      _
    %p36 = scmp.eq.s32.totalorder 0, 0
    // Predicated region
    $region26: #{_forward.1} parent=1 // pred_check
      %p37 = pneg %p36
    $region27: #{_forward.1} parent=1 // pred_check_branch
      %39 = sbr.rel (%p37) target = $region29
    $region28: #{_forward.1} parent=1 // pred_region
      %40 = vst [vmem:[#allocation2] sm:$0xff] 0.0
      %41 = vst [vmem:[#allocation2 + $0x8] sm:$0xff] 0.0
    $region29: #{_forward.1} parent=1 // pred_fallthru
      _
    %s42 = smul.u32 0, 128
    %s43 = sshra.s32 %s42, 7
    %s44 = sand.u32 %s42, 127
    %s45 = smul.addr %s43, 4
    %s46 = scalar_lea.vmem %s0, %s45
    %v47 = vld [vmem:[%s46] sm:$0xf]
    %v48 = vld [vmem:[%s46 + $0x4] sm:$0xf]
    %v49 = vld [vmem:[#allocation2] sm:$0xff]
    %v50 = vld [vmem:[#allocation2 + $0x8] sm:$0xff]
    %v51 = vld [vmem:[%s1] sm:$0xf]
    %v52 = vld [vmem:[%s1 + $0x4] sm:$0xf]
    %v53 = vld [vmem:[%s1 + $0x8] sm:$0xf]
    %v54 = vld [vmem:[%s1 + $0xc] sm:$0xf]
    %v55 = vld [vmem:[%s1 + $0x10] sm:$0xf]
    %v56 = vld [vmem:[%s1 + $0x14] sm:$0xf]
    %v57 = vld [vmem:[%s1 + $0x18] sm:$0xf]
    %v58 = vld [vmem:[%s1 + $0x1c] sm:$0xf]
    %v59 = vld [vmem:[%s1 + $0x20] sm:$0xf]
    %v60 = vld [vmem:[%s1 + $0x24] sm:$0xf]
    %v61 = vld [vmem:[%s1 + $0x28] sm:$0xf]
    %v62 = vld [vmem:[%s1 + $0x2c] sm:$0xf]
    %v63 = vld [vmem:[%s1 + $0x30] sm:$0xf]
    %v64 = vld [vmem:[%s1 + $0x34] sm:$0xf]
    %v65 = vld [vmem:[%s1 + $0x38] sm:$0xf]
    %v66 = vld [vmem:[%s1 + $0x3c] sm:$0xf]
    %v69 = vunpack.c.l.b16 %v47
    %v70 = vunpack.c.l.b16 %v48
    %v71 = vpack.c.b16 %v70, %v69
    %v89 = vunpack.c.l.b16 %v51
    %v90 = vunpack.c.l.b16 %v52
    %v91 = vunpack.c.l.b16 %v53
    %v92 = vunpack.c.l.b16 %v54
    %v93 = vunpack.c.l.b16 %v55
    %v94 = vunpack.c.l.b16 %v56
    %v95 = vunpack.c.l.b16 %v57
    %v96 = vunpack.c.l.b16 %v58
    %v97 = vunpack.c.l.b16 %v59
    %v98 = vunpack.c.l.b16 %v60
    %v99 = vunpack.c.l.b16 %v61
    %v100 = vunpack.c.l.b16 %v62
    %v101 = vunpack.c.l.b16 %v63
    %v102 = vunpack.c.l.b16 %v64
    %v103 = vunpack.c.l.b16 %v65
    %v104 = vunpack.c.l.b16 %v66
    %v105 = vpack.c.b16 %v90, %v89
    %v106 = vpack.c.b16 %v92, %v91
    %v107 = vpack.c.b16 %v94, %v93
    %v108 = vpack.c.b16 %v96, %v95
    %v109 = vpack.c.b16 %v98, %v97
    %v110 = vpack.c.b16 %v100, %v99
    %v111 = vpack.c.b16 %v102, %v101
    %v112 = vpack.c.b16 %v104, %v103
    %121 = vmatpush.bf16.msra.mxu0 %v112
    %122 = vmatpush.bf16.msra.mxu0 %v111
    %123 = vmatpush.bf16.msra.mxu0 %v110
    %124 = vmatpush.bf16.msra.mxu0 %v109
    %125 = vmatpush.bf16.msra.mxu0 %v108
    %126 = vmatpush.bf16.msra.mxu0 %v107
    %127 = vmatpush.bf16.msra.mxu0 %v106
    %128 = vmatpush.bf16.msra.mxu0 %v105
    %129 = vmatmul.bf16.gmra.mxu0 %v71
    %v130 = vpop.f32.mrf.mxu0
    %v131 = vadd.f32 0.0, %v130
    %v132 = vpop.f32.mrf.mxu0
    %v133 = vadd.f32 0.0, %v132
    %134 = vdwg.mxu0
    %v135 = vadd.f32 %v49, %v131
    %v136 = vadd.f32 %v50, %v133
    %137 = vst [vmem:[#allocation2] sm:$0xff] %v135
    %138 = vst [vmem:[#allocation2 + $0x8] sm:$0xff] %v136
    // Predicated region
    $region30: #{_forward.1} parent=1 // pred_check
      %p139 = pneg %p36
    $region31: #{_forward.1} parent=1 // pred_check_branch
      %141 = sbr.rel (%p139) target = $region33
    $region32: #{_forward.1} parent=1 // pred_region
      %v142 = vld [vmem:[%s3] sm:$0xf]
      %v143 = vld [vmem:[%s3 + $0x4] sm:$0xf]
      %v144 = vld [vmem:[#allocation3] sm:$0xf]
      %v145 = vld [vmem:[#allocation3 + $0x4] sm:$0xf]
      %v146 = vld [vmem:[#allocation3 + $0x8] sm:$0xf]
      %v147 = vld [vmem:[#allocation3 + $0xc] sm:$0xf]
      %v148 = vld [vmem:[#allocation3 + $0x10] sm:$0xf]
      %v149 = vld [vmem:[#allocation3 + $0x14] sm:$0xf]
      %v150 = vld [vmem:[#allocation3 + $0x18] sm:$0xf]
      %v151 = vld [vmem:[#allocation3 + $0x1c] sm:$0xf]
      %v152 = vld [vmem:[#allocation3 + $0x20] sm:$0xf]
      %v153 = vld [vmem:[#allocation3 + $0x24] sm:$0xf]
      %v154 = vld [vmem:[#allocation3 + $0x28] sm:$0xf]
      %v155 = vld [vmem:[#allocation3 + $0x2c] sm:$0xf]
      %v156 = vld [vmem:[#allocation3 + $0x30] sm:$0xf]
      %v157 = vld [vmem:[#allocation3 + $0x34] sm:$0xf]
      %v158 = vld [vmem:[#allocation3 + $0x38] sm:$0xf]
      %v159 = vld [vmem:[#allocation3 + $0x3c] sm:$0xf]
      %v162 = vunpack.c.l.b16 %v142
      %v163 = vunpack.c.l.b16 %v143
      %v164 = vpack.c.b16 %v163, %v162
      %v182 = vunpack.c.l.b16 %v144
      %v183 = vunpack.c.l.b16 %v145
      %v184 = vunpack.c.l.b16 %v146
      %v185 = vunpack.c.l.b16 %v147
      %v186 = vunpack.c.l.b16 %v148
      %v187 = vunpack.c.l.b16 %v149
      %v188 = vunpack.c.l.b16 %v150
      %v189 = vunpack.c.l.b16 %v151
      %v190 = vunpack.c.l.b16 %v152
      %v191 = vunpack.c.l.b16 %v153
      %v192 = vunpack.c.l.b16 %v154
      %v193 = vunpack.c.l.b16 %v155
      %v194 = vunpack.c.l.b16 %v156
      %v195 = vunpack.c.l.b16 %v157
      %v196 = vunpack.c.l.b16 %v158
      %v197 = vunpack.c.l.b16 %v159
      %v198 = vpack.c.b16 %v183, %v182
      %v199 = vpack.c.b16 %v185, %v184
      %v200 = vpack.c.b16 %v187, %v186
      %v201 = vpack.c.b16 %v189, %v188
      %v202 = vpack.c.b16 %v191, %v190
      %v203 = vpack.c.b16 %v193, %v192
      %v204 = vpack.c.b16 %v195, %v194
      %v205 = vpack.c.b16 %v197, %v196
      %214 = vmatpush.bf16.msra.mxu0 %v205
      %215 = vmatpush.bf16.msra.mxu0 %v204
      %216 = vmatpush.bf16.msra.mxu0 %v203
      %217 = vmatpush.bf16.msra.mxu0 %v202
      %218 = vmatpush.bf16.msra.mxu0 %v201
      %219 = vmatpush.bf16.msra.mxu0 %v200
      %220 = vmatpush.bf16.msra.mxu0 %v199
      %221 = vmatpush.bf16.msra.mxu0 %v198
      %222 = vmatmul.bf16.gmra.mxu0 %v164
      %v223 = vpop.f32.mrf.mxu0
      %v224 = vadd.f32 0.0, %v223
      %v225 = vpop.f32.mrf.mxu0
      %v226 = vadd.f32 0.0, %v225
      %227 = vdwg.mxu0
      %v228 = vld [vmem:[#allocation2] sm:$0xff]
      %v229 = vld [vmem:[#allocation2 + $0x8] sm:$0xff]
      %v230 = vld [vmem:[%s2] sm:$0x1]
      %v232 = vperm.slane %v230, 0
      %v234 = vadd.f32 %v228, %v232
      %v235 = vadd.f32 %v229, %v232
      %v236 = vadd.f32 %v234, %v224
      %v237 = vadd.f32 %v235, %v226
      %v238 = vpack.c.bf16 %v236, %v236
      %v239 = vpack.c.bf16 %v237, %v237
      %240 = vst [vmem:[%s5] sm:$0xf] %v238
      %241 = vst [vmem:[%s5 + $0x4] sm:$0xf] %v239
    $region33: #{_forward.1} parent=1 // pred_fallthru
      _
    // Predicated region
    $region34: #{_forward.1} parent=1 // pred_check
      _
    $region35: #{_forward.1} parent=1 // pred_check_branch
      %243 = sbr.rel (0) target = $region37
    $region36: #{_forward.1} parent=1 // pred_region
      _
    $region37: #{_forward.1} parent=1 // pred_fallthru
      _
    // Predicated region
    $region38: #{_forward.1} parent=1 // pred_check
      _
    $region39: #{_forward.1} parent=1 // pred_check_branch
      %245 = sbr.rel (0) target = $region41
    $region40: #{_forward.1} parent=1 // pred_region
      _
    $region41: #{_forward.1} parent=1 // pred_fallthru
      _
    %246 = vsyncpa [#allocation4], 1

</llo_original>
